<compile_context>
chip_gen: v7x
topology: tpu7x:2x2x1
jax: 0.10.0
libtpu: 0.0.40
codegen_flags: <defaults>
</compile_context>

<pallas_src>
import math

import jax
import jax.numpy as jnp
from jax import lax
from jax.experimental import pallas as pl
from jax.experimental.pallas import tpu as pltpu


def _round_up(v, m):
    return (v + m - 1) // m * m


def conv_lora_kernel(patches_ref, w_ref, bias_ref, out_ref, acc_ref):
    k = pl.program_id(2)

    @pl.when(k == 0)
    def _():
        acc_ref[...] = jnp.zeros_like(acc_ref)

    # conv-as-matmul partial product on the MXU: bf16 x bf16 -> f32 accumulate.
    acc_ref[...] += jnp.dot(patches_ref[...], w_ref[...],
                            preferred_element_type=jnp.float32)

    @pl.when(k == pl.num_programs(2) - 1)
    def _():
        # bias add folded into the finalize (once per output tile, on the VPU).
        out_ref[...] = (acc_ref[...] + bias_ref[...]).astype(out_ref.dtype)


def conv_lora_forward(x, w_base, bias, lora_A, lora_B, scaling):
    """x: [N, IC, H, W] f32; w_base: [OC, IC, KH, KW] f32;
       lora_A: [r*K, IC*K]; lora_B: [OC*K, r*K]; scaling: python float.
       Returns y: [N, OC, OH, OW] f32 (stride=1, padding=0 Conv2d defaults)."""
    N, C, H, W = x.shape
    OC, IC, KH, KW = w_base.shape
    OH, OW = H - KH + 1, W - KW + 1
    K = IC * KH * KW
    M = N * OH * OW

    # --- LoRA merge: one tiny rank-r matmul + reshape, done once outside the kernel ---
    w_eff = w_base + (lora_B @ lora_A).reshape(OC, IC, KH, KW) * scaling

    # --- im2col, column order (ic, kh, kw) to match weight.reshape(OC, IC*KH*KW) ---
    # TODO(synk): fuse im2col into the kernel (per-(kh,kw) shifted matmuls over an
    #             NHWC input) to avoid the KH*KW HBM blow-up at large conv sizes.
    cols = [x[:, :, i:i + OH, j:j + OW] for i in range(KH) for j in range(KW)]
    patches = jnp.stack(cols, axis=2)                          # [N, C, KH*KW, OH, OW]
    patches = patches.transpose(0, 3, 4, 1, 2).reshape(M, K)   # [M, IC*KH*KW]

    # --- pad lane dims only (zero columns are exact no-ops); cast operands to bf16 ---
    Kp = _round_up(K, 128)
    OCp = _round_up(OC, 128)
    patches_b = jnp.pad(patches, ((0, 0), (0, Kp - K))).astype(jnp.bfloat16)
    w_mat = jnp.pad(w_eff.reshape(OC, K).T,
                    ((0, Kp - K), (0, OCp - OC))).astype(jnp.bfloat16)
    bias_p = jnp.pad(bias, (0, OCp - OC)).reshape(1, OCp).astype(jnp.float32)

    # --- tile plan: 128-granular (clean on v5e's 4x128^2 MXU), ~0.5 MiB working set
    #     per step incl. double buffering -> safe on v7x's 64 MiB VMEM. ---
    tm = min(256, _round_up(M, 8))
    tn = 128
    tk = 256 if Kp % 256 == 0 else 128

    grid = (pl.cdiv(M, tm), OCp // tn, Kp // tk)   # reduction (K) axis last

    out = pl.pallas_call(
        conv_lora_kernel,
        out_shape=jax.ShapeDtypeStruct((M, OCp), jnp.float32),
        grid_spec=pltpu.PrefetchScalarGridSpec(
            num_scalar_prefetch=0,
            grid=grid,
            in_specs=[
                pl.BlockSpec((tm, tk), lambda i, j, k: (i, k)),   # patches tile
                pl.BlockSpec((tk, tn), lambda i, j, k: (k, j)),   # merged weight tile
                pl.BlockSpec((1, tn), lambda i, j, k: (0, j)),    # bias: resident over i, k
            ],
            out_specs=pl.BlockSpec((tm, tn), lambda i, j, k: (i, j)),
            scratch_shapes=[pltpu.VMEM((tm, tn), jnp.float32)],
        ),
        compiler_params=pltpu.CompilerParams(
            dimension_semantics=("parallel", "parallel", "arbitrary")),
    )(patches_b, w_mat, bias_p)

    # unpad OC + back to NCHW (M edge block already handled by pl.cdiv grid).
    y = out[:, :OC].reshape(N, OH, OW, OC).transpose(0, 3, 1, 2)
    return y


if __name__ == "__main__":
    # Module config: Conv2d(in_channels=4, out_channels=8, kernel_size=3), r=2, lora_alpha=4
    N, IC, H, W = 2, 4, 16, 16
    OC, KS = 8, 3
    r, lora_alpha = 2, 4
    scaling = lora_alpha / r

    key = jax.random.PRNGKey(0)
    kx, kw, kb, ka, kbb = jax.random.split(key, 5)

    x = jax.random.normal(kx, (N, IC, H, W), jnp.float32)

    # Deterministic parameter init (shapes from __init__).
    fan_in = IC * KS * KS
    bound_w = 1.0 / math.sqrt(fan_in)
    w_base = jax.random.uniform(kw, (OC, IC, KS, KS), jnp.float32, -bound_w, bound_w)
    bias = jax.random.uniform(kb, (OC,), jnp.float32, -bound_w, bound_w)
    # lora_A: (r*K, IC*K); lora_B: (OC*K, r*K).
    # (PyTorch zero-inits lora_B; small random values here so the LoRA path is exercised.)
    bound_a = math.sqrt(3.0) / math.sqrt(IC * KS)
    lora_A = jax.random.uniform(ka, (r * KS, IC * KS), jnp.float32, -bound_a, bound_a)
    lora_B = 0.1 * jax.random.normal(kbb, (OC * KS, r * KS), jnp.float32)

    y = conv_lora_forward(x, w_base, bias, lora_A, lora_B, scaling)
    y = jax.block_until_ready(y)

    # Reference: conv2d with merged effective weight, bf16 operands / f32 accumulation
    # (same numerics regime as the kernel).
    w_eff = w_base + (lora_B @ lora_A).reshape(w_base.shape) * scaling
    y_ref = lax.conv_general_dilated(
        x.astype(jnp.bfloat16), w_eff.astype(jnp.bfloat16),
        window_strides=(1, 1), padding="VALID",
        dimension_numbers=("NCHW", "OIHW", "NCHW"),
        preferred_element_type=jnp.float32,
    ) + bias.reshape(1, OC, 1, 1)

    assert y.shape == (N, OC, H - KS + 1, W - KS + 1), y.shape
    err = float(jnp.max(jnp.abs(y - y_ref)))
    assert jnp.allclose(y, y_ref, atol=1e-2, rtol=1e-2), err
    print("KERNEL_OK")
</pallas_src>

<mosaic_0001>
module attributes {stable_mosaic.version = 11 : i64} {
  func.func @conv_lora_kernel(%arg0: i32, %arg1: i32, %arg2: i32, %arg3: memref<256x128xbf16, #tpu.memory_space<vmem>>, %arg4: memref<128x128xbf16, #tpu.memory_space<vmem>>, %arg5: memref<1x128xf32, #tpu.memory_space<vmem>>, %arg6: memref<256x128xf32, #tpu.memory_space<vmem>>, %arg7: memref<256x128xf32, #tpu.memory_space<vmem>>) attributes {dimension_semantics = [#tpu.dimension_semantics<parallel>, #tpu.dimension_semantics<parallel>, #tpu.dimension_semantics<arbitrary>], iteration_bounds = array<i64: 2, 1, 1>, scalar_prefetch = 0 : i64, scratch_operands = 1 : i64, tpu.core_type = #tpu.core_type<tc>, window_params = [{transform_indices = @transform_0, window_bounds = array<i64: 256, 128>}, {transform_indices = @transform_1, window_bounds = array<i64: 128, 128>}, {transform_indices = @transform_2, window_bounds = array<i64: 1, 128>}, {transform_indices = @transform_3, window_bounds = array<i64: 256, 128>}]} {
    %c0_i32 = arith.constant 0 : i32
    %0 = arith.cmpi eq, %arg2, %c0_i32 : i32
    %1 = arith.extui %0 : i1 to i32
    %c0_i32_0 = arith.constant 0 : i32
    %2 = arith.cmpi ne, %1, %c0_i32_0 : i32
    scf.if %2 {
      %cst_10 = arith.constant 0.000000e+00 : f32
      %12 = vector.broadcast %cst_10 : f32 to vector<256x128xf32>
      %c0_11 = arith.constant 0 : index
      %c0_12 = arith.constant 0 : index
      %13 = vector.load %arg7[%c0_11, %c0_12] : memref<256x128xf32, #tpu.memory_space<vmem>>, vector<256x128xf32>
      tpu.vector_store %arg7[%c0_11, %c0_12], %12 {strides = array<i32>} : memref<256x128xf32, #tpu.memory_space<vmem>>, vector<256x128xf32>,
    } else {
    }
    %c0 = arith.constant 0 : index
    %c0_1 = arith.constant 0 : index
    %3 = vector.load %arg7[%c0, %c0_1] : memref<256x128xf32, #tpu.memory_space<vmem>>, vector<256x128xf32>
    %c0_2 = arith.constant 0 : index
    %c0_3 = arith.constant 0 : index
    %4 = vector.load %arg3[%c0_2, %c0_3] : memref<256x128xbf16, #tpu.memory_space<vmem>>, vector<256x128xbf16>
    %c0_4 = arith.constant 0 : index
    %c0_5 = arith.constant 0 : index
    %5 = vector.load %arg4[%c0_4, %c0_5] : memref<128x128xbf16, #tpu.memory_space<vmem>>, vector<128x128xbf16>
    %cst = arith.constant dense<0.000000e+00> : vector<256x128xf32>
    %6 = tpu.matmul %4, %5, %cst {dimension_numbers = #tpu.dot_dimension_numbers<[1], [0], [0], [1], [0, 0, 1, 1], [], []>} : vector<256x128xbf16>, vector<128x128xbf16>, vector<256x128xf32> -> vector<256x128xf32>
    %7 = arith.addf %3, %6 : vector<256x128xf32>
    %c0_6 = arith.constant 0 : index
    %c0_7 = arith.constant 0 : index
    %8 = vector.load %arg7[%c0_6, %c0_7] : memref<256x128xf32, #tpu.memory_space<vmem>>, vector<256x128xf32>
    tpu.vector_store %arg7[%c0_6, %c0_7], %7 {strides = array<i32>} : memref<256x128xf32, #tpu.memory_space<vmem>>, vector<256x128xf32>,
    %c0_i32_8 = arith.constant 0 : i32
    %9 = arith.cmpi eq, %arg2, %c0_i32_8 : i32
    %10 = arith.extui %9 : i1 to i32
    %c0_i32_9 = arith.constant 0 : i32
    %11 = arith.cmpi ne, %10, %c0_i32_9 : i32
    scf.if %11 {
      %c0_10 = arith.constant 0 : index
      %c0_11 = arith.constant 0 : index
      %12 = vector.load %arg7[%c0_10, %c0_11] : memref<256x128xf32, #tpu.memory_space<vmem>>, vector<256x128xf32>
      %c0_12 = arith.constant 0 : index
      %c0_13 = arith.constant 0 : index
      %13 = vector.load %arg5[%c0_12, %c0_13] : memref<1x128xf32, #tpu.memory_space<vmem>>, vector<1x128xf32>
      %14 = vector.broadcast %13 : vector<1x128xf32> to vector<256x128xf32>
      %15 = arith.addf %12, %14 : vector<256x128xf32>
      %c0_14 = arith.constant 0 : index
      %c0_15 = arith.constant 0 : index
      %16 = vector.load %arg6[%c0_14, %c0_15] : memref<256x128xf32, #tpu.memory_space<vmem>>, vector<256x128xf32>
      tpu.vector_store %arg6[%c0_14, %c0_15], %15 {strides = array<i32>} : memref<256x128xf32, #tpu.memory_space<vmem>>, vector<256x128xf32>,
    } else {
    }
    return
  }
  func.func @transform_0(%arg0: i32, %arg1: i32, %arg2: i32) -> (i32, i32) {
    %c0_i32 = arith.constant 0 : i32
    return %arg0, %arg2 : i32, i32
  }
  func.func @transform_1(%arg0: i32, %arg1: i32, %arg2: i32) -> (i32, i32) {
    %c0_i32 = arith.constant 0 : i32
    return %arg2, %arg1 : i32, i32
  }
  func.func @transform_2(%arg0: i32, %arg1: i32, %arg2: i32) -> (i32, i32) {
    %c0_i32 = arith.constant 0 : i32
    %c0_i32_0 = arith.constant 0 : i32
    return %c0_i32, %arg1 : i32, i32
  }
  func.func @transform_3(%arg0: i32, %arg1: i32, %arg2: i32) -> (i32, i32) {
    %c0_i32 = arith.constant 0 : i32
    return %arg0, %arg1 : i32, i32
  }
}

</mosaic_0001>

<llo_original>
// kernel: tpu_custom_call.1
$region0: #{tpu_custom_call.1}
  #allocation0 [shape = 'u32[]', space=smem, size = 0x4, offset = 0x4, fixed_abs, tag = 'smem constant byte address 0x4 - core index']
  #allocation1 [shape = 'u32[144,128]{1,0:T(1,128)}', space=vmem, size = 0x12000, scoped, tag = 'internal scratch']
  #allocation2 [shape = 'f32[256,128]{1,0:T(8,128)}', space=vmem, size = 0x20000, scoped, tag = 'scratch operand']
  %s0 = inlined_call_operand.hbm [shape: bf16[392,128], index: 0, kind: input, shape index: {}]
  %s1 = inlined_call_operand.hbm [shape: bf16[128,128], index: 1, kind: input, shape index: {}]
  %s2 = inlined_call_operand.vmem [shape: f32[1,128], index: 2, kind: input, shape index: {}]
  %s3 = inlined_call_operand.hbm [shape: f32[392,128], index: 3, kind: output, shape index: {}]
  %s4 = sld [smem:[#allocation0]]
  $region61: #{tpu_custom_call.1} parent=0
    _
  %s6 = ssub.s32 1, %s4
  %s7 = scalar_select 0, %s6, %s4
  $region1: #{tpu_custom_call.1} parent=0
    #allocation3 [shape = 'u8[131072]{0}', space=vmem, size = 0x20000, scoped, tag = 'input window, operand 0']
    #allocation4 [shape = 's32[2]{0}', space=sflag, size = 0x8, scoped, tag = 'scoped memory for tpu_custom_call.1']
    #allocation5 [shape = 's32[2]{0}', space=sflag, size = 0x8, scoped, tag = 'scoped memory for tpu_custom_call.1']
    #allocation6 [shape = 'u8[32768]{0}', space=vmem, size = 0x8000, scoped, tag = 'input window, operand 1, single buffered']
    #allocation7 [shape = 's32[1]{0}', space=sflag, size = 0x4, scoped, tag = 'scoped memory for tpu_custom_call.1']
    #allocation8 [shape = 'u8[262144]{0}', space=vmem, size = 0x40000, scoped, tag = 'output window, operand 0']
    %8 = vsyncpa [#allocation4], 0
    %s9 = scalar_lea.sflag [#allocation4], 1
    %10 = vsyncpa %s9, 0
    %11 = vsyncpa [#allocation7], 0
    %12 = vsyncpa [#allocation5], 0
    %s13 = scalar_lea.sflag [#allocation5], 1
    %14 = vsyncpa %s13, 0
    loop: start=0, step=1, limit=4
    $region2: #{tpu_custom_call.1} parent=1 // loop_pre_header
      _
    $region3: #{tpu_custom_call.1} parent=1 // loop_header
      %s16 = sphi 0, %s20
      %p17 = scmp.ge.s32.totalorder %s16, 4
      %s23 = sphi 0, %s42
      %s24 = sphi 0, %s38
      %s25 = sphi 0, %s34
      %s26 = sphi 0, %s23
      %s27 = sphi 0, %s24
      %s28 = sphi 0, %s25
      %s29 = sphi 0, %s26
      %s30 = sphi 0, %s27
      %s31 = sphi 0, %s28
      %s47 = sphi 0, %s49
      %s50 = sphi 0, %s47
      %s51 = sphi 0, %s50
      %s67 = sphi 0, %s51
      %s75 = sphi 0, %s77
      %s78 = sphi 0, %s75
      %s79 = sphi 0, %s78
      %s95 = sphi 0, %s79
      %s101 = sphi 0, %s103
      %s104 = sphi 0, %s101
      %s105 = sphi 0, %s104
      %s121 = sphi 0, %s105
      %s129 = sphi 0, %s131
      %s132 = sphi 0, %s129
      %s133 = sphi 0, %s132
      %s149 = sphi 0, %s133
    $region4: #{tpu_custom_call.1} parent=1 // loop_header_branch
      %19 = sbr.rel (%p17) target = $region8
    $region5: #{tpu_custom_call.1} parent=1 // loop_body
      %s21 = ssub.s32 %s16, 1
      %s22 = ssub.s32 %s16, 2
      %s32 = sadd.s32 1, %s25
      %p33 = scmp.ge.s32.totalorder %s32, 1
      %s34 = scalar_select %p33, 0, %s32
      %s35 = sadd.s32 1, %s24
      %s36 = scalar_select %p33, %s35, %s24
      %p37 = scmp.ge.s32.totalorder %s36, 1
      %s38 = scalar_select %p37, 0, %s36
      %s39 = sadd.s32 1, %s23
      %s40 = scalar_select %p37, %s39, %s23
      %p41 = scmp.ge.s32.totalorder %s40, 2
      %s42 = scalar_select %p41, 0, %s40
      %s43 = ssub.s32 %s23, %s42
      %s44 = ssub.s32 %s25, %s34
      %s45 = sor.u32 %s43, %s44
      %p46 = scmp.eq.s32.totalorder %s45, 0
      %s48 = sadd.s32 %s47, 1
      %s49 = scalar_select %p46, %s47, %s48
      %p52 = pneg %p46
      %p53 = scmp.eq.s32.totalorder %s16, 1
      %p54 = por %p52, %p53
      %p55 = scmp.ne.s32.totalorder %s47, %s50
      %p56 = scmp.eq.s32.totalorder %s16, 0
      %p57 = por %p55, %p56
      %p58 = scmp.ne.s32.totalorder %s47, %s50
      %p59 = scmp.eq.s32.totalorder %s21, 1
      %p60 = por %p58, %p59
      %p61 = scmp.ne.s32.totalorder %s50, %s51
      %p62 = scmp.eq.s32.totalorder %s21, 0
      %p63 = por %p61, %p62
      %p64 = scmp.ne.s32.totalorder %s50, %s51
      %p65 = scmp.eq.s32.totalorder %s22, 1
      %p66 = por %p64, %p65
      %p68 = scmp.ne.s32.totalorder %s51, %s67
      %p69 = scmp.eq.s32.totalorder %s22, 0
      %p70 = por %p68, %p69
      %s71 = ssub.s32 %s25, %s34
      %s72 = ssub.s32 %s24, %s38
      %s73 = sor.u32 %s71, %s72
      %p74 = scmp.eq.s32.totalorder %s73, 0
      %s76 = sadd.s32 %s75, 1
      %s77 = scalar_select %p74, %s75, %s76
      %p80 = pneg %p74
      %p81 = scmp.eq.s32.totalorder %s16, 1
      %p82 = por %p80, %p81
      %p83 = scmp.ne.s32.totalorder %s75, %s78
      %p84 = scmp.eq.s32.totalorder %s16, 0
      %p85 = por %p83, %p84
      %p86 = scmp.ne.s32.totalorder %s75, %s78
      %p87 = scmp.eq.s32.totalorder %s21, 1
      %p88 = por %p86, %p87
      %p89 = scmp.ne.s32.totalorder %s78, %s79
      %p90 = scmp.eq.s32.totalorder %s21, 0
      %p91 = por %p89, %p90
      %p92 = scmp.ne.s32.totalorder %s78, %s79
      %p93 = scmp.eq.s32.totalorder %s22, 1
      %p94 = por %p92, %p93
      %p96 = scmp.ne.s32.totalorder %s79, %s95
      %p97 = scmp.eq.s32.totalorder %s22, 0
      %p98 = por %p96, %p97
      %s99 = ssub.s32 %s24, %s38
      %p100 = scmp.eq.s32.totalorder %s99, 0
      %s102 = sadd.s32 %s101, 1
      %s103 = scalar_select %p100, %s101, %s102
      %p106 = pneg %p100
      %p107 = scmp.eq.s32.totalorder %s16, 1
      %p108 = por %p106, %p107
      %p109 = scmp.ne.s32.totalorder %s101, %s104
      %p110 = scmp.eq.s32.totalorder %s16, 0
      %p111 = por %p109, %p110
      %p112 = scmp.ne.s32.totalorder %s101, %s104
      %p113 = scmp.eq.s32.totalorder %s21, 1
      %p114 = por %p112, %p113
      %p115 = scmp.ne.s32.totalorder %s104, %s105
      %p116 = scmp.eq.s32.totalorder %s21, 0
      %p117 = por %p115, %p116
      %p118 = scmp.ne.s32.totalorder %s104, %s105
      %p119 = scmp.eq.s32.totalorder %s22, 1
      %p120 = por %p118, %p119
      %p122 = scmp.ne.s32.totalorder %s105, %s121
      %p123 = scmp.eq.s32.totalorder %s22, 0
      %p124 = por %p122, %p123
      %s125 = ssub.s32 %s23, %s42
      %s126 = ssub.s32 %s24, %s38
      %s127 = sor.u32 %s125, %s126
      %p128 = scmp.eq.s32.totalorder %s127, 0
      %s130 = sadd.s32 %s129, 1
      %s131 = scalar_select %p128, %s129, %s130
      %p134 = pneg %p128
      %p135 = scmp.eq.s32.totalorder %s16, 1
      %p136 = por %p134, %p135
      %p137 = scmp.ne.s32.totalorder %s129, %s132
      %p138 = scmp.eq.s32.totalorder %s16, 0
      %p139 = por %p137, %p138
      %p140 = scmp.ne.s32.totalorder %s129, %s132
      %p141 = scmp.eq.s32.totalorder %s21, 1
      %p142 = por %p140, %p141
      %p143 = scmp.ne.s32.totalorder %s132, %s133
      %p144 = scmp.eq.s32.totalorder %s21, 0
      %p145 = por %p143, %p144
      %p146 = scmp.ne.s32.totalorder %s132, %s133
      %p147 = scmp.eq.s32.totalorder %s22, 1
      %p148 = por %p146, %p147
      %p150 = scmp.ne.s32.totalorder %s133, %s149
      %p151 = scmp.eq.s32.totalorder %s22, 0
      %p152 = por %p150, %p151
      %p153 = scmp.le.s32.totalorder 1, %s16
      %p154 = scmp.lt.s32.totalorder %s16, 3
      %p155 = pnand %p153, %p154
      %p156 = pneg %p155
      // Predicated region
      $region9: #{tpu_custom_call.1} parent=5 // pred_check
        _
      $region10: #{tpu_custom_call.1} parent=5 // pred_check_branch
        %158 = sbr.rel (%p155) target = $region12
      $region11: #{tpu_custom_call.1} parent=5 // pred_region
        %s159 = ssub.s32 %s16, 1
        // Predicated region
        $region13: #{tpu_custom_call.1} parent=11 // pred_check
          %p160 = pneg %p91
        $region14: #{tpu_custom_call.1} parent=11 // pred_check_branch
          %162 = sbr.rel (%p160) target = $region16
        $region15: #{tpu_custom_call.1} parent=11 // pred_region
          %s163 = smul.u32 16, %s28
          %s165 = ssub.s32 1024, 1024
          %166 = vsyncadd [#allocation7], %s165
          %s167 = sadd.s32 %s27, %s163
          %s168 = smul.addr %s167, 64
          %s169 = scalar_lea.hbm %s1, %s168
          %s170 = sshll.u32 [#allocation6], 4
          %s171 = int_to_ptr.vmem [resolvable:$true] %s170
          %176 = dma.hbm_to_vmem [thread:$0]  %s169, 1024, %s171, [#allocation7], 64, 64, 4
        $region16: #{tpu_custom_call.1} parent=11 // pred_fallthru
          _
        // Predicated region
        $region17: #{tpu_custom_call.1} parent=11 // pred_check
          %p177 = pneg %p117
        $region18: #{tpu_custom_call.1} parent=11 // pred_check_branch
          %179 = sbr.rel (%p177) target = $region20
        $region19: #{tpu_custom_call.1} parent=11 // pred_region
          %p180 = scmp.lt.s32.totalorder %s27, 0
          %s181 = scalar_select %p180, %s27, 0
          %s182 = scalar_lea.vmem %s2, %s181
        $region20: #{tpu_custom_call.1} parent=11 // pred_fallthru
          _
      $region12: #{tpu_custom_call.1} parent=5 // pred_fallthru
        _
      %p183 = scmp.lt.s32.totalorder %s16, 2
      // Predicated region
      $region21: #{tpu_custom_call.1} parent=5 // pred_check
        %p184 = pneg %p183
      $region22: #{tpu_custom_call.1} parent=5 // pred_check_branch
        %186 = sbr.rel (%p184) target = $region24
      $region23: #{tpu_custom_call.1} parent=5 // pred_region
        // Predicated region
        $region25: #{tpu_custom_call.1} parent=23 // pred_check
          %p187 = pneg %p57
        $region26: #{tpu_custom_call.1} parent=23 // pred_check_branch
          %189 = sbr.rel (%p187) target = $region28
        $region27: #{tpu_custom_call.1} parent=23 // pred_region
          %s190 = sand.u32 %s47, 1
          %s191 = scalar_lea.sflag [#allocation4], %s190
          %s192 = sand.u32 %s47, 1
          %s193 = smul.addr %s192, 128
          %s194 = scalar_lea.vmem [#allocation3], %s193
          %s195 = smul.u32 32, %s23
          %s196 = ssub.s32 49, %s195
          %p197 = scmp.lt.s32.totalorder %s196, 32
          %s198 = scalar_select %p197, %s196, 32
          %s199 = smul.u32 64, %s198
          %s201 = ssub.s32 2048, %s199
          %202 = vsyncadd %s191, %s201
          %p203 = scmp.ne.s32.totalorder 0, %s199
          %s204 = sadd.s32 %s25, %s195
          %s205 = smul.addr %s204, 64
          %s206 = scalar_lea.hbm %s0, %s205
          %s207 = smul.u32 4, %s198
          %s208 = sshll.u32 %s194, 4
          %s209 = int_to_ptr.vmem [resolvable:$true] %s208
          %s210 = sshll.u32 %s207, 4
          %214 = dma.hbm_to_vmem [thread:$0]  (%p203), %s206, %s210, %s209, %s191, 64, 64, 4
        $region28: #{tpu_custom_call.1} parent=23 // pred_fallthru
          _
      $region24: #{tpu_custom_call.1} parent=5 // pred_fallthru
        _
      %p215 = scmp.le.s32.totalorder 1, %s16
      %p216 = scmp.lt.s32.totalorder %s16, 3
      %p217 = pnand %p215, %p216
      %p218 = pneg %p217
      // Predicated region
      $region29: #{tpu_custom_call.1} parent=5 // pred_check
        _
      $region30: #{tpu_custom_call.1} parent=5 // pred_check_branch
        %220 = sbr.rel (%p217) target = $region32
      $region31: #{tpu_custom_call.1} parent=5 // pred_region
        %s221 = ssub.s32 %s16, 1
        %s222 = sand.u32 %s50, 1
        %s223 = scalar_lea.sflag [#allocation4], %s222
        %s224 = sand.u32 %s50, 1
        %s225 = smul.addr %s224, 128
        %s226 = scalar_lea.vmem [#allocation3], %s225
        // Predicated region
        $region33: #{tpu_custom_call.1} parent=31 // pred_check
          %p227 = pneg %p63
        $region34: #{tpu_custom_call.1} parent=31 // pred_check_branch
          %229 = sbr.rel (%p227) target = $region36
        $region35: #{tpu_custom_call.1} parent=31 // pred_region
          %230 = dma.done %s223, 2048
        $region36: #{tpu_custom_call.1} parent=31 // pred_fallthru
          _
        // Predicated region
        $region37: #{tpu_custom_call.1} parent=31 // pred_check
          %p231 = pneg %p91
        $region38: #{tpu_custom_call.1} parent=31 // pred_check_branch
          %233 = sbr.rel (%p231) target = $region40
        $region39: #{tpu_custom_call.1} parent=31 // pred_region
          %234 = dma.done [#allocation7], 1024
        $region40: #{tpu_custom_call.1} parent=31 // pred_fallthru
          _
        %s235 = sand.u32 %s50, 1
        %s236 = scalar_lea.sflag [#allocation4], %s235
        %s237 = sand.u32 %s50, 1
        %s238 = smul.addr %s237, 128
        %s239 = scalar_lea.vmem [#allocation3], %s238
        %p240 = pneg %p63
        %p241 = pneg %p60
        %p242 = pneg %p91
        %p243 = pneg %p88
        %p244 = scmp.lt.s32.totalorder %s27, 0
        %s245 = scalar_select %p244, %s27, 0
        %s246 = scalar_lea.vmem %s2, %s245
        %p247 = pneg %p117
        %p248 = pneg %p114
        %p249 = pneg %p145
        %p250 = pneg %p142
        %s251 = sand.u32 %s132, 1
        %s252 = scalar_lea.sflag [#allocation5], %s251
        %s253 = sand.u32 %s132, 1
        %s254 = smul.addr %s253, 256
        %s255 = scalar_lea.vmem [#allocation8], %s254
        %s256 = smul.u32 32, %s26
        %s257 = ssub.s32 49, %s256
        %p258 = scmp.lt.s32.totalorder %s257, 32
        %s259 = scalar_select %p258, %s257, 32
        %s260 = smul.u32 64, %s259
        %s261 = smul.u32 16, %s28
        %p262 = scmp.lt.s32.totalorder %s27, 0
        %s263 = scalar_select %p262, %s27, 0
        %s264 = scalar_lea.vmem %s2, %s263
        %s265 = smul.u32 32, %s26
        %s266 = ssub.s32 49, %s265
        %p267 = scmp.lt.s32.totalorder %s266, 32
        %s268 = scalar_select %p267, %s266, 32
        %s269 = smul.u32 128, %s268
        %p271 = scmp.eq.s32.totalorder %s28, 0
        // Predicated region
        $region41: #{tpu_custom_call.1} parent=31 // pred_check
          %p272 = pneg %p271
        $region42: #{tpu_custom_call.1} parent=31 // pred_check_branch
          %274 = sbr.rel (%p272) target = $region44
        $region43: #{tpu_custom_call.1} parent=31 // pred_region
          %275 = vst [vmem:[#allocation2] sm:$0xff] 0.0
          %276 = vst [vmem:[#allocation2 + $0x8] sm:$0xff] 0.0
          %277 = vst [vmem:[#allocation2 + $0x10] sm:$0xff] 0.0
          %278 = vst [vmem:[#allocation2 + $0x18] sm:$0xff] 0.0
          %279 = vst [vmem:[#allocation2 + $0x20] sm:$0xff] 0.0
          %280 = vst [vmem:[#allocation2 + $0x28] sm:$0xff] 0.0
          %281 = vst [vmem:[#allocation2 + $0x30] sm:$0xff] 0.0
          %282 = vst [vmem:[#allocation2 + $0x38] sm:$0xff] 0.0
          %283 = vst [vmem:[#allocation2 + $0x40] sm:$0xff] 0.0
          %284 = vst [vmem:[#allocation2 + $0x48] sm:$0xff] 0.0
          %285 = vst [vmem:[#allocation2 + $0x50] sm:$0xff] 0.0
          %286 = vst [vmem:[#allocation2 + $0x58] sm:$0xff] 0.0
          %287 = vst [vmem:[#allocation2 + $0x60] sm:$0xff] 0.0
          %288 = vst [vmem:[#allocation2 + $0x68] sm:$0xff] 0.0
          %289 = vst [vmem:[#allocation2 + $0x70] sm:$0xff] 0.0
          %290 = vst [vmem:[#allocation2 + $0x78] sm:$0xff] 0.0
          %291 = vst [vmem:[#allocation2 + $0x80] sm:$0xff] 0.0
          %292 = vst [vmem:[#allocation2 + $0x88] sm:$0xff] 0.0
          %293 = vst [vmem:[#allocation2 + $0x90] sm:$0xff] 0.0
          %294 = vst [vmem:[#allocation2 + $0x98] sm:$0xff] 0.0
          %295 = vst [vmem:[#allocation2 + $0xa0] sm:$0xff] 0.0
          %296 = vst [vmem:[#allocation2 + $0xa8] sm:$0xff] 0.0
          %297 = vst [vmem:[#allocation2 + $0xb0] sm:$0xff] 0.0
          %298 = vst [vmem:[#allocation2 + $0xb8] sm:$0xff] 0.0
          %299 = vst [vmem:[#allocation2 + $0xc0] sm:$0xff] 0.0
          %300 = vst [vmem:[#allocation2 + $0xc8] sm:$0xff] 0.0
          %301 = vst [vmem:[#allocation2 + $0xd0] sm:$0xff] 0.0
          %302 = vst [vmem:[#allocation2 + $0xd8] sm:$0xff] 0.0
          %303 = vst [vmem:[#allocation2 + $0xe0] sm:$0xff] 0.0
          %304 = vst [vmem:[#allocation2 + $0xe8] sm:$0xff] 0.0
          %305 = vst [vmem:[#allocation2 + $0xf0] sm:$0xff] 0.0
          %306 = vst [vmem:[#allocation2 + $0xf8] sm:$0xff] 0.0
        $region44: #{tpu_custom_call.1} parent=31 // pred_fallthru
          _
        %v307 = vld [vmem:[#allocation2] sm:$0xff]
        %v308 = vld [vmem:[#allocation2 + $0x8] sm:$0xff]
        %v309 = vld [vmem:[#allocation2 + $0x10] sm:$0xff]
        %v310 = vld [vmem:[#allocation2 + $0x18] sm:$0xff]
        %v311 = vld [vmem:[#allocation2 + $0x20] sm:$0xff]
        %v312 = vld [vmem:[#allocation2 + $0x28] sm:$0xff]
        %v313 = vld [vmem:[#allocation2 + $0x30] sm:$0xff]
        %v314 = vld [vmem:[#allocation2 + $0x38] sm:$0xff]
        %v315 = vld [vmem:[#allocation2 + $0x40] sm:$0xff]
        %v316 = vld [vmem:[#allocation2 + $0x48] sm:$0xff]
        %v317 = vld [vmem:[#allocation2 + $0x50] sm:$0xff]
        %v318 = vld [vmem:[#allocation2 + $0x58] sm:$0xff]
        %v319 = vld [vmem:[#allocation2 + $0x60] sm:$0xff]
        %v320 = vld [vmem:[#allocation2 + $0x68] sm:$0xff]
        %v321 = vld [vmem:[#allocation2 + $0x70] sm:$0xff]
        %v322 = vld [vmem:[#allocation2 + $0x78] sm:$0xff]
        %v323 = vld [vmem:[#allocation2 + $0x80] sm:$0xff]
        %v324 = vld [vmem:[#allocation2 + $0x88] sm:$0xff]
        %v325 = vld [vmem:[#allocation2 + $0x90] sm:$0xff]
        %v326 = vld [vmem:[#allocation2 + $0x98] sm:$0xff]
        %v327 = vld [vmem:[#allocation2 + $0xa0] sm:$0xff]
        %v328 = vld [vmem:[#allocation2 + $0xa8] sm:$0xff]
        %v329 = vld [vmem:[#allocation2 + $0xb0] sm:$0xff]
        %v330 = vld [vmem:[#allocation2 + $0xb8] sm:$0xff]
        %v331 = vld [vmem:[#allocation2 + $0xc0] sm:$0xff]
        %v332 = vld [vmem:[#allocation2 + $0xc8] sm:$0xff]
        %v333 = vld [vmem:[#allocation2 + $0xd0] sm:$0xff]
        %v334 = vld [vmem:[#allocation2 + $0xd8] sm:$0xff]
        %v335 = vld [vmem:[#allocation2 + $0xe0] sm:$0xff]
        %v336 = vld [vmem:[#allocation2 + $0xe8] sm:$0xff]
        %v337 = vld [vmem:[#allocation2 + $0xf0] sm:$0xff]
        %v338 = vld [vmem:[#allocation2 + $0xf8] sm:$0xff]
        %v339 = vld [vmem:[%s226] sm:$0xf]
        %v340 = vld [vmem:[%s226 + $0x4] sm:$0xf]
        %v341 = vld [vmem:[%s226 + $0x8] sm:$0xf]
        %v342 = vld [vmem:[%s226 + $0xc] sm:$0xf]
        %v343 = vld [vmem:[%s226 + $0x10] sm:$0xf]
        %v344 = vld [vmem:[%s226 + $0x14] sm:$0xf]
        %v345 = vld [vmem:[%s226 + $0x18] sm:$0xf]
        %v346 = vld [vmem:[%s226 + $0x1c] sm:$0xf]
        %v347 = vld [vmem:[%s226 + $0x20] sm:$0xf]
        %v348 = vld [vmem:[%s226 + $0x24] sm:$0xf]
        %v349 = vld [vmem:[%s226 + $0x28] sm:$0xf]
        %v350 = vld [vmem:[%s226 + $0x2c] sm:$0xf]
        %v351 = vld [vmem:[%s226 + $0x30] sm:$0xf]
        %v352 = vld [vmem:[%s226 + $0x34] sm:$0xf]
        %v353 = vld [vmem:[%s226 + $0x38] sm:$0xf]
        %v354 = vld [vmem:[%s226 + $0x3c] sm:$0xf]
        %v355 = vld [vmem:[%s226 + $0x40] sm:$0xf]
        %v356 = vld [vmem:[%s226 + $0x44] sm:$0xf]
        %v357 = vld [vmem:[%s226 + $0x48] sm:$0xf]
        %v358 = vld [vmem:[%s226 + $0x4c] sm:$0xf]
        %v359 = vld [vmem:[%s226 + $0x50] sm:$0xf]
        %v360 = vld [vmem:[%s226 + $0x54] sm:$0xf]
        %v361 = vld [vmem:[%s226 + $0x58] sm:$0xf]
        %v362 = vld [vmem:[%s226 + $0x5c] sm:$0xf]
        %v363 = vld [vmem:[%s226 + $0x60] sm:$0xf]
        %v364 = vld [vmem:[%s226 + $0x64] sm:$0xf]
        %v365 = vld [vmem:[%s226 + $0x68] sm:$0xf]
        %v366 = vld [vmem:[%s226 + $0x6c] sm:$0xf]
        %v367 = vld [vmem:[%s226 + $0x70] sm:$0xf]
        %v368 = vld [vmem:[%s226 + $0x74] sm:$0xf]
        %v369 = vld [vmem:[%s226 + $0x78] sm:$0xf]
        %v370 = vld [vmem:[%s226 + $0x7c] sm:$0xf]
        %v371 = vld [vmem:[#allocation6] sm:$0xf]
        %v372 = vld [vmem:[#allocation6 + $0x4] sm:$0xf]
        %v373 = vld [vmem:[#allocation6 + $0x8] sm:$0xf]
        %v374 = vld [vmem:[#allocation6 + $0xc] sm:$0xf]
        %v375 = vld [vmem:[#allocation6 + $0x10] sm:$0xf]
        %v376 = vld [vmem:[#allocation6 + $0x14] sm:$0xf]
        %v377 = vld [vmem:[#allocation6 + $0x18] sm:$0xf]
        %v378 = vld [vmem:[#allocation6 + $0x1c] sm:$0xf]
        %v379 = vld [vmem:[#allocation6 + $0x20] sm:$0xf]
        %v380 = vld [vmem:[#allocation6 + $0x24] sm:$0xf]
        %v381 = vld [vmem:[#allocation6 + $0x28] sm:$0xf]
        %v382 = vld [vmem:[#allocation6 + $0x2c] sm:$0xf]
        %v383 = vld [vmem:[#allocation6 + $0x30] sm:$0xf]
        %v384 = vld [vmem:[#allocation6 + $0x34] sm:$0xf]
        %v385 = vld [vmem:[#allocation6 + $0x38] sm:$0xf]
        %v386 = vld [vmem:[#allocation6 + $0x3c] sm:$0xf]
        %v419 = vunpack.c.l.b16 %v339
        %v420 = vunpack.c.l.b16 %v340
        %v421 = vunpack.c.l.b16 %v341
        %v422 = vunpack.c.l.b16 %v342
        %v423 = vunpack.c.l.b16 %v343
        %v424 = vunpack.c.l.b16 %v344
        %v425 = vunpack.c.l.b16 %v345
        %v426 = vunpack.c.l.b16 %v346
        %v427 = vunpack.c.l.b16 %v347
        %v428 = vunpack.c.l.b16 %v348
        %v429 = vunpack.c.l.b16 %v349
        %v430 = vunpack.c.l.b16 %v350
        %v431 = vunpack.c.l.b16 %v351
        %v432 = vunpack.c.l.b16 %v352
        %v433 = vunpack.c.l.b16 %v353
        %v434 = vunpack.c.l.b16 %v354
        %v435 = vunpack.c.l.b16 %v355
        %v436 = vunpack.c.l.b16 %v356
        %v437 = vunpack.c.l.b16 %v357
        %v438 = vunpack.c.l.b16 %v358
        %v439 = vunpack.c.l.b16 %v359
        %v440 = vunpack.c.l.b16 %v360
        %v441 = vunpack.c.l.b16 %v361
        %v442 = vunpack.c.l.b16 %v362
        %v443 = vunpack.c.l.b16 %v363
        %v444 = vunpack.c.l.b16 %v364
        %v445 = vunpack.c.l.b16 %v365
        %v446 = vunpack.c.l.b16 %v366
        %v447 = vunpack.c.l.b16 %v367
        %v448 = vunpack.c.l.b16 %v368
        %v449 = vunpack.c.l.b16 %v369
        %v450 = vunpack.c.l.b16 %v370
        %v451 = vpack.c.b16 %v420, %v419
        %v452 = vpack.c.b16 %v422, %v421
        %v453 = vpack.c.b16 %v424, %v423
        %v454 = vpack.c.b16 %v426, %v425
        %v455 = vpack.c.b16 %v428, %v427
        %v456 = vpack.c.b16 %v430, %v429
        %v457 = vpack.c.b16 %v432, %v431
        %v458 = vpack.c.b16 %v434, %v433
        %v459 = vpack.c.b16 %v436, %v435
        %v460 = vpack.c.b16 %v438, %v437
        %v461 = vpack.c.b16 %v440, %v439
        %v462 = vpack.c.b16 %v442, %v441
        %v463 = vpack.c.b16 %v444, %v443
        %v464 = vpack.c.b16 %v446, %v445
        %v465 = vpack.c.b16 %v448, %v447
        %v466 = vpack.c.b16 %v450, %v449
        %v499 = vunpack.c.l.b16 %v371
        %v500 = vunpack.c.l.b16 %v372
        %v501 = vunpack.c.l.b16 %v373
        %v502 = vunpack.c.l.b16 %v374
        %v503 = vunpack.c.l.b16 %v375
        %v504 = vunpack.c.l.b16 %v376
        %v505 = vunpack.c.l.b16 %v377
        %v506 = vunpack.c.l.b16 %v378
        %v507 = vunpack.c.l.b16 %v379
        %v508 = vunpack.c.l.b16 %v380
        %v509 = vunpack.c.l.b16 %v381
        %v510 = vunpack.c.l.b16 %v382
        %v511 = vunpack.c.l.b16 %v383
        %v512 = vunpack.c.l.b16 %v384
        %v513 = vunpack.c.l.b16 %v385
        %v514 = vunpack.c.l.b16 %v386
        %v515 = vpack.c.b16 %v500, %v499
        %v516 = vpack.c.b16 %v502, %v501
        %v517 = vpack.c.b16 %v504, %v503
        %v518 = vpack.c.b16 %v506, %v505
        %v519 = vpack.c.b16 %v508, %v507
        %v520 = vpack.c.b16 %v510, %v509
        %v521 = vpack.c.b16 %v512, %v511
        %v522 = vpack.c.b16 %v514, %v513
        %531 = vmatprep.subr.bf16.mxu0 0
        %532 = vmatpush1.bf16.msra.mxu0 %v515
        %533 = vmatprep.subr.bf16.mxu0 0
        %534 = vmatpush1.bf16.msra.mxu0 %v516
        %535 = vmatprep.subr.bf16.mxu0 0
        %536 = vmatpush1.bf16.msra.mxu0 %v517
        %537 = vmatprep.subr.bf16.mxu0 0
        %538 = vmatpush1.bf16.msra.mxu0 %v518
        %539 = vmatprep.subr.bf16.mxu0 0
        %540 = vmatpush1.bf16.msra.mxu0 %v519
        %541 = vmatprep.subr.bf16.mxu0 0
        %542 = vmatpush1.bf16.msra.mxu0 %v520
        %543 = vmatprep.subr.bf16.mxu0 0
        %544 = vmatpush1.bf16.msra.mxu0 %v521
        %545 = vmatprep.subr.bf16.mxu0 0
        %546 = vmatpush1.bf16.msra.mxu0 %v522
        %547 = vmatprep.subr.bf16.mxu0 0
        %548 = vmatpush1.bf16.msra.mxu0 0
        %549 = vmatprep.subr.bf16.mxu0 0
        %550 = vmatpush1.bf16.msra.mxu0 0
        %551 = vmatprep.subr.bf16.mxu0 0
        %552 = vmatpush1.bf16.msra.mxu0 0
        %553 = vmatprep.subr.bf16.mxu0 0
        %554 = vmatpush1.bf16.msra.mxu0 0
        %555 = vmatprep.subr.bf16.mxu0 0
        %556 = vmatpush1.bf16.msra.mxu0 0
        %557 = vmatprep.subr.bf16.mxu0 0
        %558 = vmatpush1.bf16.msra.mxu0 0
        %559 = vmatprep.subr.bf16.mxu0 0
        %560 = vmatpush1.bf16.msra.mxu0 0
        %561 = vmatprep.subr.bf16.mxu0 0
        %562 = vmatpush1.bf16.msra.mxu0 0
        %563 = vmatprep.mubr.bf16.mxu0 0
        %564 = vmatmul.mubr.bf16.gmra.mrb[0].mxu0 %v451
        %v565 = vpop.f32.mrb[0].mxu0
        %v566 = vadd.f32 0.0, %v565
        %v567 = vpop.f32.mrb[0].mxu0
        %v568 = vpop.f32.mrb[0].mxu0
        %v569 = vadd.f32 0.0, %v568
        %v570 = vpop.f32.mrb[0].mxu0
        %571 = vmatprep.mubr.bf16.mxu0 0
        %572 = vmatmul.mubr.bf16.gmra.mrb[0].mxu0 %v452
        %v573 = vpop.f32.mrb[0].mxu0
        %v574 = vadd.f32 0.0, %v573
        %v575 = vpop.f32.mrb[0].mxu0
        %v576 = vpop.f32.mrb[0].mxu0
        %v577 = vadd.f32 0.0, %v576
        %v578 = vpop.f32.mrb[0].mxu0
        %579 = vmatprep.mubr.bf16.mxu0 0
        %580 = vmatmul.mubr.bf16.gmra.mrb[0].mxu0 %v453
        %v581 = vpop.f32.mrb[0].mxu0
        %v582 = vadd.f32 0.0, %v581
        %v583 = vpop.f32.mrb[0].mxu0
        %v584 = vpop.f32.mrb[0].mxu0
        %v585 = vadd.f32 0.0, %v584
        %v586 = vpop.f32.mrb[0].mxu0
        %587 = vmatprep.mubr.bf16.mxu0 0
        %588 = vmatmul.mubr.bf16.gmra.mrb[0].mxu0 %v454
        %v589 = vpop.f32.mrb[0].mxu0
        %v590 = vadd.f32 0.0, %v589
        %v591 = vpop.f32.mrb[0].mxu0
        %v592 = vpop.f32.mrb[0].mxu0
        %v593 = vadd.f32 0.0, %v592
        %v594 = vpop.f32.mrb[0].mxu0
        %595 = vmatprep.mubr.bf16.mxu0 0
        %596 = vmatmul.mubr.bf16.gmra.mrb[0].mxu0 %v455
        %v597 = vpop.f32.mrb[0].mxu0
        %v598 = vadd.f32 0.0, %v597
        %v599 = vpop.f32.mrb[0].mxu0
        %v600 = vpop.f32.mrb[0].mxu0
        %v601 = vadd.f32 0.0, %v600
        %v602 = vpop.f32.mrb[0].mxu0
        %603 = vmatprep.mubr.bf16.mxu0 0
        %604 = vmatmul.mubr.bf16.gmra.mrb[0].mxu0 %v456
        %v605 = vpop.f32.mrb[0].mxu0
        %v606 = vadd.f32 0.0, %v605
        %v607 = vpop.f32.mrb[0].mxu0
        %v608 = vpop.f32.mrb[0].mxu0
        %v609 = vadd.f32 0.0, %v608
        %v610 = vpop.f32.mrb[0].mxu0
        %611 = vmatprep.mubr.bf16.mxu0 0
        %612 = vmatmul.mubr.bf16.gmra.mrb[0].mxu0 %v457
        %v613 = vpop.f32.mrb[0].mxu0
        %v614 = vadd.f32 0.0, %v613
        %v615 = vpop.f32.mrb[0].mxu0
        %v616 = vpop.f32.mrb[0].mxu0
        %v617 = vadd.f32 0.0, %v616
        %v618 = vpop.f32.mrb[0].mxu0
        %619 = vmatprep.mubr.bf16.mxu0 0
        %620 = vmatmul.mubr.bf16.gmra.mrb[0].mxu0 %v458
        %v621 = vpop.f32.mrb[0].mxu0
        %v622 = vadd.f32 0.0, %v621
        %v623 = vpop.f32.mrb[0].mxu0
        %v624 = vpop.f32.mrb[0].mxu0
        %v625 = vadd.f32 0.0, %v624
        %v626 = vpop.f32.mrb[0].mxu0
        %627 = vmatprep.mubr.bf16.mxu0 0
        %628 = vmatmul.mubr.bf16.gmra.mrb[0].mxu0 %v459
        %v629 = vpop.f32.mrb[0].mxu0
        %v630 = vadd.f32 0.0, %v629
        %v631 = vpop.f32.mrb[0].mxu0
        %v632 = vpop.f32.mrb[0].mxu0
        %v633 = vadd.f32 0.0, %v632
        %v634 = vpop.f32.mrb[0].mxu0
        %635 = vmatprep.mubr.bf16.mxu0 0
        %636 = vmatmul.mubr.bf16.gmra.mrb[0].mxu0 %v460
        %v637 = vpop.f32.mrb[0].mxu0
        %v638 = vadd.f32 0.0, %v637
        %v639 = vpop.f32.mrb[0].mxu0
        %v640 = vpop.f32.mrb[0].mxu0
        %v641 = vadd.f32 0.0, %v640
        %v642 = vpop.f32.mrb[0].mxu0
        %643 = vmatprep.mubr.bf16.mxu0 0
        %644 = vmatmul.mubr.bf16.gmra.mrb[0].mxu0 %v461
        %v645 = vpop.f32.mrb[0].mxu0
        %v646 = vadd.f32 0.0, %v645
        %v647 = vpop.f32.mrb[0].mxu0
        %v648 = vpop.f32.mrb[0].mxu0
        %v649 = vadd.f32 0.0, %v648
        %v650 = vpop.f32.mrb[0].mxu0
        %651 = vmatprep.mubr.bf16.mxu0 0
        %652 = vmatmul.mubr.bf16.gmra.mrb[0].mxu0 %v462
        %v653 = vpop.f32.mrb[0].mxu0
        %v654 = vadd.f32 0.0, %v653
        %v655 = vpop.f32.mrb[0].mxu0
        %v656 = vpop.f32.mrb[0].mxu0
        %v657 = vadd.f32 0.0, %v656
        %v658 = vpop.f32.mrb[0].mxu0
        %659 = vmatprep.mubr.bf16.mxu0 0
        %660 = vmatmul.mubr.bf16.gmra.mrb[0].mxu0 %v463
        %v661 = vpop.f32.mrb[0].mxu0
        %v662 = vadd.f32 0.0, %v661
        %v663 = vpop.f32.mrb[0].mxu0
        %v664 = vpop.f32.mrb[0].mxu0
        %v665 = vadd.f32 0.0, %v664
        %v666 = vpop.f32.mrb[0].mxu0
        %667 = vmatprep.mubr.bf16.mxu0 0
        %668 = vmatmul.mubr.bf16.gmra.mrb[0].mxu0 %v464
        %v669 = vpop.f32.mrb[0].mxu0
        %v670 = vadd.f32 0.0, %v669
        %v671 = vpop.f32.mrb[0].mxu0
        %v672 = vpop.f32.mrb[0].mxu0
        %v673 = vadd.f32 0.0, %v672
        %v674 = vpop.f32.mrb[0].mxu0
        %675 = vmatprep.mubr.bf16.mxu0 0
        %676 = vmatmul.mubr.bf16.gmra.mrb[0].mxu0 %v465
        %v677 = vpop.f32.mrb[0].mxu0
        %v678 = vadd.f32 0.0, %v677
        %v679 = vpop.f32.mrb[0].mxu0
        %v680 = vpop.f32.mrb[0].mxu0
        %v681 = vadd.f32 0.0, %v680
        %v682 = vpop.f32.mrb[0].mxu0
        %683 = vmatprep.mubr.bf16.mxu0 0
        %684 = vmatmul.mubr.bf16.gmra.mrb[0].mxu0 %v466
        %v685 = vpop.f32.mrb[0].mxu0
        %v686 = vadd.f32 0.0, %v685
        %v687 = vpop.f32.mrb[0].mxu0
        %v688 = vpop.f32.mrb[0].mxu0
        %v689 = vadd.f32 0.0, %v688
        %v690 = vpop.f32.mrb[0].mxu0
        %691 = vdwg.mxu0
        %v692 = vadd.f32 %v307, %v566
        %v693 = vadd.f32 %v308, %v569
        %v694 = vadd.f32 %v309, %v574
        %v695 = vadd.f32 %v310, %v577
        %v696 = vadd.f32 %v311, %v582
        %v697 = vadd.f32 %v312, %v585
        %v698 = vadd.f32 %v313, %v590
        %v699 = vadd.f32 %v314, %v593
        %v700 = vadd.f32 %v315, %v598
        %v701 = vadd.f32 %v316, %v601
        %v702 = vadd.f32 %v317, %v606
        %v703 = vadd.f32 %v318, %v609
        %v704 = vadd.f32 %v319, %v614
        %v705 = vadd.f32 %v320, %v617
        %v706 = vadd.f32 %v321, %v622
        %v707 = vadd.f32 %v322, %v625
        %v708 = vadd.f32 %v323, %v630
        %v709 = vadd.f32 %v324, %v633
        %v710 = vadd.f32 %v325, %v638
        %v711 = vadd.f32 %v326, %v641
        %v712 = vadd.f32 %v327, %v646
        %v713 = vadd.f32 %v328, %v649
        %v714 = vadd.f32 %v329, %v654
        %v715 = vadd.f32 %v330, %v657
        %v716 = vadd.f32 %v331, %v662
        %v717 = vadd.f32 %v332, %v665
        %v718 = vadd.f32 %v333, %v670
        %v719 = vadd.f32 %v334, %v673
        %v720 = vadd.f32 %v335, %v678
        %v721 = vadd.f32 %v336, %v681
        %v722 = vadd.f32 %v337, %v686
        %v723 = vadd.f32 %v338, %v689
        %724 = vst [vmem:[#allocation2] sm:$0xff] %v692
        %725 = vst [vmem:[#allocation2 + $0x8] sm:$0xff] %v693
        %726 = vst [vmem:[#allocation2 + $0x10] sm:$0xff] %v694
        %727 = vst [vmem:[#allocation2 + $0x18] sm:$0xff] %v695
        %728 = vst [vmem:[#allocation2 + $0x20] sm:$0xff] %v696
        %729 = vst [vmem:[#allocation2 + $0x28] sm:$0xff] %v697
        %730 = vst [vmem:[#allocation2 + $0x30] sm:$0xff] %v698
        %731 = vst [vmem:[#allocation2 + $0x38] sm:$0xff] %v699
        %732 = vst [vmem:[#allocation2 + $0x40] sm:$0xff] %v700
        %733 = vst [vmem:[#allocation2 + $0x48] sm:$0xff] %v701
        %734 = vst [vmem:[#allocation2 + $0x50] sm:$0xff] %v702
        %735 = vst [vmem:[#allocation2 + $0x58] sm:$0xff] %v703
        %736 = vst [vmem:[#allocation2 + $0x60] sm:$0xff] %v704
        %737 = vst [vmem:[#allocation2 + $0x68] sm:$0xff] %v705
        %738 = vst [vmem:[#allocation2 + $0x70] sm:$0xff] %v706
        %739 = vst [vmem:[#allocation2 + $0x78] sm:$0xff] %v707
        %740 = vst [vmem:[#allocation2 + $0x80] sm:$0xff] %v708
        %741 = vst [vmem:[#allocation2 + $0x88] sm:$0xff] %v709
        %742 = vst [vmem:[#allocation2 + $0x90] sm:$0xff] %v710
        %743 = vst [vmem:[#allocation2 + $0x98] sm:$0xff] %v711
        %744 = vst [vmem:[#allocation2 + $0xa0] sm:$0xff] %v712
        %745 = vst [vmem:[#allocation2 + $0xa8] sm:$0xff] %v713
        %746 = vst [vmem:[#allocation2 + $0xb0] sm:$0xff] %v714
        %747 = vst [vmem:[#allocation2 + $0xb8] sm:$0xff] %v715
        %748 = vst [vmem:[#allocation2 + $0xc0] sm:$0xff] %v716
        %749 = vst [vmem:[#allocation2 + $0xc8] sm:$0xff] %v717
        %750 = vst [vmem:[#allocation2 + $0xd0] sm:$0xff] %v718
        %751 = vst [vmem:[#allocation2 + $0xd8] sm:$0xff] %v719
        %752 = vst [vmem:[#allocation2 + $0xe0] sm:$0xff] %v720
        %753 = vst [vmem:[#allocation2 + $0xe8] sm:$0xff] %v721
        %754 = vst [vmem:[#allocation2 + $0xf0] sm:$0xff] %v722
        %755 = vst [vmem:[#allocation2 + $0xf8] sm:$0xff] %v723
        // Predicated region
        $region45: #{tpu_custom_call.1} parent=31 // pred_check
          %p756 = pneg %p271
        $region46: #{tpu_custom_call.1} parent=31 // pred_check_branch
          %758 = sbr.rel (%p756) target = $region48
        $region47: #{tpu_custom_call.1} parent=31 // pred_region
          %v759 = vld [vmem:[#allocation2] sm:$0xff]
          %v760 = vld [vmem:[#allocation2 + $0x8] sm:$0xff]
          %v761 = vld [vmem:[#allocation2 + $0x10] sm:$0xff]
          %v762 = vld [vmem:[#allocation2 + $0x18] sm:$0xff]
          %v763 = vld [vmem:[#allocation2 + $0x20] sm:$0xff]
          %v764 = vld [vmem:[#allocation2 + $0x28] sm:$0xff]
          %v765 = vld [vmem:[#allocation2 + $0x30] sm:$0xff]
          %v766 = vld [vmem:[#allocation2 + $0x38] sm:$0xff]
          %v767 = vld [vmem:[#allocation2 + $0x40] sm:$0xff]
          %v768 = vld [vmem:[#allocation2 + $0x48] sm:$0xff]
          %v769 = vld [vmem:[#allocation2 + $0x50] sm:$0xff]
          %v770 = vld [vmem:[#allocation2 + $0x58] sm:$0xff]
          %v771 = vld [vmem:[#allocation2 + $0x60] sm:$0xff]
          %v772 = vld [vmem:[#allocation2 + $0x68] sm:$0xff]
          %v773 = vld [vmem:[#allocation2 + $0x70] sm:$0xff]
          %v774 = vld [vmem:[#allocation2 + $0x78] sm:$0xff]
          %v775 = vld [vmem:[#allocation2 + $0x80] sm:$0xff]
          %v776 = vld [vmem:[#allocation2 + $0x88] sm:$0xff]
          %v777 = vld [vmem:[#allocation2 + $0x90] sm:$0xff]
          %v778 = vld [vmem:[#allocation2 + $0x98] sm:$0xff]
          %v779 = vld [vmem:[#allocation2 + $0xa0] sm:$0xff]
          %v780 = vld [vmem:[#allocation2 + $0xa8] sm:$0xff]
          %v781 = vld [vmem:[#allocation2 + $0xb0] sm:$0xff]
          %v782 = vld [vmem:[#allocation2 + $0xb8] sm:$0xff]
          %v783 = vld [vmem:[#allocation2 + $0xc0] sm:$0xff]
          %v784 = vld [vmem:[#allocation2 + $0xc8] sm:$0xff]
          %v785 = vld [vmem:[#allocation2 + $0xd0] sm:$0xff]
          %v786 = vld [vmem:[#allocation2 + $0xd8] sm:$0xff]
          %v787 = vld [vmem:[#allocation2 + $0xe0] sm:$0xff]
          %v788 = vld [vmem:[#allocation2 + $0xe8] sm:$0xff]
          %v789 = vld [vmem:[#allocation2 + $0xf0] sm:$0xff]
          %v790 = vld [vmem:[#allocation2 + $0xf8] sm:$0xff]
          %v791 = vld [vmem:[%s264] sm:$0x1]
          %v793 = vlaneseq
          %v794 = vshrl.u32 %v793, 7
          %v795 = vsub.s32 0, %v794
          %v796 = vrot.slane %v791, %v795
          %v798 = vadd.f32 %v759, %v796
          %v799 = vadd.f32 %v760, %v796
          %v800 = vadd.f32 %v761, %v796
          %v801 = vadd.f32 %v762, %v796
          %v802 = vadd.f32 %v763, %v796
          %v803 = vadd.f32 %v764, %v796
          %v804 = vadd.f32 %v765, %v796
          %v805 = vadd.f32 %v766, %v796
          %v806 = vadd.f32 %v767, %v796
          %v807 = vadd.f32 %v768, %v796
          %v808 = vadd.f32 %v769, %v796
          %v809 = vadd.f32 %v770, %v796
          %v810 = vadd.f32 %v771, %v796
          %v811 = vadd.f32 %v772, %v796
          %v812 = vadd.f32 %v773, %v796
          %v813 = vadd.f32 %v774, %v796
          %v814 = vadd.f32 %v775, %v796
          %v815 = vadd.f32 %v776, %v796
          %v816 = vadd.f32 %v777, %v796
          %v817 = vadd.f32 %v778, %v796
          %v818 = vadd.f32 %v779, %v796
          %v819 = vadd.f32 %v780, %v796
          %v820 = vadd.f32 %v781, %v796
          %v821 = vadd.f32 %v782, %v796
          %v822 = vadd.f32 %v783, %v796
          %v823 = vadd.f32 %v784, %v796
          %v824 = vadd.f32 %v785, %v796
          %v825 = vadd.f32 %v786, %v796
          %v826 = vadd.f32 %v787, %v796
          %v827 = vadd.f32 %v788, %v796
          %v828 = vadd.f32 %v789, %v796
          %v829 = vadd.f32 %v790, %v796
          %830 = vst [vmem:[%s255] sm:$0xff] %v798
          %831 = vst [vmem:[%s255 + $0x8] sm:$0xff] %v799
          %832 = vst [vmem:[%s255 + $0x10] sm:$0xff] %v800
          %833 = vst [vmem:[%s255 + $0x18] sm:$0xff] %v801
          %834 = vst [vmem:[%s255 + $0x20] sm:$0xff] %v802
          %835 = vst [vmem:[%s255 + $0x28] sm:$0xff] %v803
          %836 = vst [vmem:[%s255 + $0x30] sm:$0xff] %v804
          %837 = vst [vmem:[%s255 + $0x38] sm:$0xff] %v805
          %838 = vst [vmem:[%s255 + $0x40] sm:$0xff] %v806
          %839 = vst [vmem:[%s255 + $0x48] sm:$0xff] %v807
          %840 = vst [vmem:[%s255 + $0x50] sm:$0xff] %v808
          %841 = vst [vmem:[%s255 + $0x58] sm:$0xff] %v809
          %842 = vst [vmem:[%s255 + $0x60] sm:$0xff] %v810
          %843 = vst [vmem:[%s255 + $0x68] sm:$0xff] %v811
          %844 = vst [vmem:[%s255 + $0x70] sm:$0xff] %v812
          %845 = vst [vmem:[%s255 + $0x78] sm:$0xff] %v813
          %846 = vst [vmem:[%s255 + $0x80] sm:$0xff] %v814
          %847 = vst [vmem:[%s255 + $0x88] sm:$0xff] %v815
          %848 = vst [vmem:[%s255 + $0x90] sm:$0xff] %v816
          %849 = vst [vmem:[%s255 + $0x98] sm:$0xff] %v817
          %850 = vst [vmem:[%s255 + $0xa0] sm:$0xff] %v818
          %851 = vst [vmem:[%s255 + $0xa8] sm:$0xff] %v819
          %852 = vst [vmem:[%s255 + $0xb0] sm:$0xff] %v820
          %853 = vst [vmem:[%s255 + $0xb8] sm:$0xff] %v821
          %854 = vst [vmem:[%s255 + $0xc0] sm:$0xff] %v822
          %855 = vst [vmem:[%s255 + $0xc8] sm:$0xff] %v823
          %856 = vst [vmem:[%s255 + $0xd0] sm:$0xff] %v824
          %857 = vst [vmem:[%s255 + $0xd8] sm:$0xff] %v825
          %858 = vst [vmem:[%s255 + $0xe0] sm:$0xff] %v826
          %859 = vst [vmem:[%s255 + $0xe8] sm:$0xff] %v827
          %860 = vst [vmem:[%s255 + $0xf0] sm:$0xff] %v828
          %861 = vst [vmem:[%s255 + $0xf8] sm:$0xff] %v829
        $region48: #{tpu_custom_call.1} parent=31 // pred_fallthru
          _
        %s862 = sand.u32 %s132, 1
        %s863 = scalar_lea.sflag [#allocation5], %s862
        %s864 = sand.u32 %s132, 1
        %s865 = smul.addr %s864, 256
        %s866 = scalar_lea.vmem [#allocation8], %s865
        // Predicated region
        $region49: #{tpu_custom_call.1} parent=31 // pred_check
          %p867 = pneg %p142
        $region50: #{tpu_custom_call.1} parent=31 // pred_check_branch
          %869 = sbr.rel (%p867) target = $region52
        $region51: #{tpu_custom_call.1} parent=31 // pred_region
          %s870 = smul.u32 32, %s26
          %s871 = ssub.s32 49, %s870
          %p872 = scmp.lt.s32.totalorder %s871, 32
          %s873 = scalar_select %p872, %s871, 32
          %s874 = smul.u32 128, %s873
          %s876 = ssub.s32 4096, %s874
          %877 = vsyncadd %s863, %s876
          %p878 = scmp.ne.s32.totalorder 0, %s874
          %s879 = sadd.s32 %s27, %s870
          %s880 = smul.addr %s879, 128
          %s881 = scalar_lea.hbm %s3, %s880
          %s882 = smul.u32 8, %s873
          %s883 = sshll.u32 %s866, 4
          %s884 = int_to_ptr.vmem [resolvable:$true] %s883
          %s885 = sshll.u32 %s882, 4
          %889 = dma.vmem_to_hbm [thread:$0]  (%p878), %s884, %s885, %s881, %s863, 128, 128, 8
        $region52: #{tpu_custom_call.1} parent=31 // pred_fallthru
          _
      $region32: #{tpu_custom_call.1} parent=5 // pred_fallthru
        _
      %p890 = scmp.le.s32.totalorder 2, %s16
      // Predicated region
      $region53: #{tpu_custom_call.1} parent=5 // pred_check
        %p891 = pneg %p890
      $region54: #{tpu_custom_call.1} parent=5 // pred_check_branch
        %893 = sbr.rel (%p891) target = $region56
      $region55: #{tpu_custom_call.1} parent=5 // pred_region
        %s894 = ssub.s32 %s16, 2
        // Predicated region
        $region57: #{tpu_custom_call.1} parent=55 // pred_check
          %p895 = pneg %p148
        $region58: #{tpu_custom_call.1} parent=55 // pred_check_branch
          %897 = sbr.rel (%p895) target = $region60
        $region59: #{tpu_custom_call.1} parent=55 // pred_region
          %s898 = sand.u32 %s133, 1
          %s899 = scalar_lea.sflag [#allocation5], %s898
          %s900 = sand.u32 %s133, 1
          %s901 = smul.addr %s900, 256
          %s902 = scalar_lea.vmem [#allocation8], %s901
          %903 = dma.done %s899, 4096
        $region60: #{tpu_custom_call.1} parent=55 // pred_fallthru
          _
      $region56: #{tpu_custom_call.1} parent=5 // pred_fallthru
        _
    $region6: #{tpu_custom_call.1} parent=1 // loop_footer
      %s20 = sadd.s32 1, %s16
    $region7: #{tpu_custom_call.1} parent=1 // loop_footer_branch
      %15 = sbr.rel target = $region3
    $region8: #{tpu_custom_call.1} parent=1 // loop_exit
      _
    %904 = vsyncpa [#allocation4], 1
    %s905 = scalar_lea.sflag [#allocation4], 1
    %906 = vsyncpa %s905, 1
    %907 = vsyncpa [#allocation7], 1
    %908 = vsyncpa [#allocation5], 1
    %s909 = scalar_lea.sflag [#allocation5], 1
    %910 = vsyncpa %s909, 1

</llo_original>
